<compile_context>
chip_gen: v6e
topology: v6e:2x2x1
jax: 0.10.0
libtpu: 0.0.40
codegen_flags: <defaults>
</compile_context>

<pallas_src>
import functools

import numpy as np
import jax
import jax.numpy as jnp
from jax.experimental import pallas as pl
from jax.experimental.pallas import tpu as pltpu


# ----------------------------- Pallas kernel ------------------------------- #

def _gem_kernel(p_ref, x_ref, o_ref, *, eps, inv_hw):
    """GeM pooling for one (ROW_TILE, HW) slab of flattened (B*C, H*W) rows."""
    p = p_ref[0]                                   # learnable exponent (SMEM scalar)
    x = x_ref[...].astype(jnp.float32)             # (ROW_TILE, HW); upcast if bf16
    xc = jnp.maximum(x, eps)                       # clamp(min=eps)  (> 0, log safe)
    xp = jnp.exp(p * jnp.log(xc))                  # xc ** p, traced exponent (EUP)
    mean = jnp.sum(xp, axis=-1, keepdims=True) * inv_hw    # (ROW_TILE, 1) spatial mean
    pooled = jnp.exp(jnp.log(mean) * (1.0 / p))             # mean ** (1/p)
    o_ref[...] = pooled.astype(o_ref.dtype)


# ------------------------------ host wrapper ------------------------------- #

def gem_pallas(x, p, *, eps=1e-6, row_tile=None):
    """x: (B, C, H, W), p: (1,) float32 -> (B, C, 1, 1) with x's dtype."""
    B, C, H, W = x.shape
    HW = H * W
    rows = B * C
    itemsize = jnp.dtype(x.dtype).itemsize

    x2 = x.reshape(rows, HW)                       # contiguous, free fold of B*C
    p_arr = jnp.asarray(p, jnp.float32).reshape(1)

    if row_tile is None:
        if rows <= 8:
            row_tile = rows                        # full row axis (== array dim: allowed)
        else:
            # ~1 MiB input slab per step, multiple of 8 sublanes, capped at rows.
            target = max(8, ((1 << 20) // max(HW * itemsize, 1)) // 8 * 8)
            row_tile = min(max(rows // 8 * 8, 8), target)
    grid = (pl.cdiv(rows, row_tile),)

    # Explicit VMEM budget: double-buffered input + output slabs + 1 MiB slack.
    vmem_limit = int(2 * row_tile * HW * itemsize + 2 * row_tile * itemsize + (1 << 20))
    vmem_limit = min(max(vmem_limit, 4 << 20), 100 << 20)

    cost = pl.CostEstimate(
        flops=3 * rows * HW,                       # clamp + scale + sum per element
        transcendentals=2 * rows * HW,             # log + exp per element
        bytes_accessed=rows * HW * itemsize + rows * itemsize,
    )

    out = pl.pallas_call(
        functools.partial(_gem_kernel, eps=float(eps), inv_hw=1.0 / float(HW)),
        grid=grid,
        in_specs=[
            pl.BlockSpec(memory_space=pltpu.MemorySpace.SMEM),   # p (scalar)
            pl.BlockSpec((row_tile, HW), lambda r: (r, 0)),      # (B*C, HW) row slab
        ],
        out_specs=pl.BlockSpec((row_tile, 1), lambda r: (r, 0)),
        out_shape=jax.ShapeDtypeStruct((rows, 1), x.dtype),
        compiler_params=pltpu.CompilerParams(
            dimension_semantics=("parallel",),
            vmem_limit_bytes=vmem_limit,
        ),
        cost_estimate=cost,
    )(p_arr, x2)

    return out.reshape(B, C, 1, 1)


# --------------------------- pure-JAX reference ----------------------------- #

def _reference(x, p, eps=1e-6):
    pv = jnp.reshape(p, ())
    xc = jnp.maximum(x.astype(jnp.float32), eps)
    pooled = jnp.mean(xc ** pv, axis=(-2, -1), keepdims=True)
    return (pooled ** (1.0 / pv)).astype(x.dtype)


# --------------------------------- main ------------------------------------ #

if __name__ == "__main__":
    B, C, H, W = 2, 4, 16, 16

    key = jax.random.PRNGKey(0)
    x = jax.random.normal(key, (B, C, H, W), dtype=jnp.float32)
    p = jnp.ones((1,), dtype=jnp.float32) * 3.0    # Parameter(torch.ones(1) * 3)

    out = jax.block_until_ready(gem_pallas(x, p, eps=1e-6))

    ref = _reference(x, p, eps=1e-6)
    assert out.shape == (B, C, 1, 1)
    assert np.allclose(np.asarray(out), np.asarray(ref), atol=1e-5, rtol=1e-4)

    print("KERNEL_OK")
</pallas_src>

<mosaic_0001>
module attributes {stable_mosaic.version = 11 : i64} {
  func.func @_gem_kernel(%arg0: i32, %arg1: memref<1xf32, #tpu.memory_space<smem>>, %arg2: memref<8x256xf32, #tpu.memory_space<vmem>>, %arg3: memref<8x1xf32, #tpu.memory_space<vmem>>) attributes {dimension_semantics = [#tpu.dimension_semantics<parallel>], iteration_bounds = array<i64: 1>, scalar_prefetch = 0 : i64, scratch_operands = 0 : i64, tpu.core_type = #tpu.core_type<tc>, window_params = [{transform_indices = @transform_0, window_bounds = array<i64: 1>}, {transform_indices = @transform_1, window_bounds = array<i64: 8, 256>}, {transform_indices = @transform_2, window_bounds = array<i64: 8, 1>}]} {
    %c0 = arith.constant 0 : index
    %0 = memref.load %arg1[%c0] : memref<1xf32, #tpu.memory_space<smem>>
    %c0_0 = arith.constant 0 : index
    %c0_1 = arith.constant 0 : index
    %1 = vector.load %arg2[%c0_0, %c0_1] : memref<8x256xf32, #tpu.memory_space<vmem>>, vector<8x256xf32>
    %cst = arith.constant 9.99999997E-7 : f32
    %2 = vector.broadcast %cst : f32 to vector<8x256xf32>
    %3 = arith.maximumf %1, %2 : vector<8x256xf32>
    %4 = math.log %3 : vector<8x256xf32>
    %5 = vector.broadcast %0 : f32 to vector<8x256xf32>
    %6 = arith.mulf %5, %4 : vector<8x256xf32>
    %7 = math.exp %6 : vector<8x256xf32>
    %cst_2 = arith.constant dense<0.000000e+00> : vector<8xf32>
    %8 = vector.multi_reduction <add>, %7, %cst_2 [1] : vector<8x256xf32> to vector<8xf32>
    %9 = vector.shape_cast %8 : vector<8xf32> to vector<8x1xf32>
    %cst_3 = arith.constant 3.906250e-03 : f32
    %10 = vector.broadcast %cst_3 : f32 to vector<8x1xf32>
    %11 = arith.mulf %9, %10 : vector<8x1xf32>
    %12 = math.log %11 : vector<8x1xf32>
    %cst_4 = arith.constant 1.000000e+00 : f32
    %13 = arith.divf %cst_4, %0 : f32
    %14 = vector.broadcast %13 : f32 to vector<8x1xf32>
    %15 = arith.mulf %12, %14 : vector<8x1xf32>
    %16 = math.exp %15 : vector<8x1xf32>
    %c0_5 = arith.constant 0 : index
    %c0_6 = arith.constant 0 : index
    %17 = vector.load %arg3[%c0_5, %c0_6] : memref<8x1xf32, #tpu.memory_space<vmem>>, vector<8x1xf32>
    tpu.vector_store %arg3[%c0_5, %c0_6], %16 {strides = array<i32>} : memref<8x1xf32, #tpu.memory_space<vmem>>, vector<8x1xf32>,
    return
  }
  func.func @transform_0(%arg0: i32) -> i32 {
    %c0_i32 = arith.constant 0 : i32
    %c0_i32_0 = arith.constant 0 : i32
    return %c0_i32 : i32
  }
  func.func @transform_1(%arg0: i32) -> (i32, i32) {
    %c0_i32 = arith.constant 0 : i32
    %c0_i32_0 = arith.constant 0 : i32
    return %arg0, %c0_i32 : i32, i32
  }
  func.func @transform_2(%arg0: i32) -> (i32, i32) {
    %c0_i32 = arith.constant 0 : i32
    %c0_i32_0 = arith.constant 0 : i32
    return %arg0, %c0_i32 : i32, i32
  }
}

</mosaic_0001>

<llo_original>
// kernel: tpu_custom_call.1
$region0: #{tpu_custom_call.1}
  #allocation0 [shape = 'u32[]', space=smem, size = 0x4, offset = 0x4, fixed_abs, tag = 'smem constant byte address 0x4 - core index']
  #allocation1 [shape = 'u32[144,128]{1,0:T(1,128)}', space=vmem, size = 0x12000, scoped, tag = 'internal scratch']
  #allocation2 [shape = 'f32[1]{0:T(128)S(6)}', space=smem, size = 0x200, scoped, tag = 'scoped memory for tpu_custom_call.1']
  %s0 = inlined_call_operand.<no memory space> [shape: f32[1], index: 0, kind: input, shape index: {}]
  %s1 = inlined_call_operand.hbm [shape: f32[8,256], index: 1, kind: input, shape index: {}]
  %s2 = inlined_call_operand.vmem [shape: f32[8,1], index: 2, kind: output, shape index: {}]
  %s3 = sld [smem:[#allocation0]]
  $region22: #{tpu_custom_call.1} parent=0
    _
  %s5 = ssub.s32 1, %s3
  %s6 = scalar_select 0, %s5, %s3
  %7 = sst [smem:[#allocation2]] %s0
  $region1: #{tpu_custom_call.1} parent=0
    #allocation3 [shape = 'u8[8192]{0}', space=vmem, size = 0x2000, scoped, tag = 'input window, operand 1, single buffered']
    #allocation4 [shape = 's32[1]{0}', space=sflag, size = 0x4, scoped, tag = 'scoped memory for tpu_custom_call.1']
    %8 = vsyncpa [#allocation4], 0
    // Predicated region
    $region2: #{tpu_custom_call.1} parent=1 // pred_check
      _
    $region3: #{tpu_custom_call.1} parent=1 // pred_check_branch
      %10 = sbr.rel (0) target = $region5
    $region4: #{tpu_custom_call.1} parent=1 // pred_region
      _
    $region5: #{tpu_custom_call.1} parent=1 // pred_fallthru
      _
    // Predicated region
    $region6: #{tpu_custom_call.1} parent=1 // pred_check
      _
    $region7: #{tpu_custom_call.1} parent=1 // pred_check_branch
      %12 = sbr.rel (0) target = $region9
    $region8: #{tpu_custom_call.1} parent=1 // pred_region
      %s14 = ssub.s32 256, 256
      %15 = vsyncadd [#allocation4], %s14
      %s17 = sshll.u32 [#allocation3], 4
      %s18 = int_to_ptr.vmem [resolvable:$true] %s17
      %20 = dma.hbm_to_vmem [thread:$0]  %s1, 256, %s18, [#allocation4]
    $region9: #{tpu_custom_call.1} parent=1 // pred_fallthru
      _
    // Predicated region
    $region10: #{tpu_custom_call.1} parent=1 // pred_check
      _
    $region11: #{tpu_custom_call.1} parent=1 // pred_check_branch
      %22 = sbr.rel (0) target = $region13
    $region12: #{tpu_custom_call.1} parent=1 // pred_region
      %23 = dma.done [#allocation4], 256
    $region13: #{tpu_custom_call.1} parent=1 // pred_fallthru
      _
    %s24 = sld [smem:[#allocation2]]
    %v25 = vld [vmem:[#allocation3] sm:$0xff]
    %v26 = vld [vmem:[#allocation3 + $0x8] sm:$0xff]
    %v27 = vmax.f32 %v25, 1e-06
    %v28 = vmax.f32 %v26, 1e-06
    %v29 = vlog2.pop %v27
    %v30 = vmul.f32 %v29, 0.6931472
    %v31 = vlog2.pop %v28
    %v32 = vmul.f32 %v31, 0.6931472
    %v33 = vstv %s24
    %v34 = vmul.f32 %v33, %v30
    %v35 = vmul.f32 %v33, %v32
    %v36 = vmul.f32 %v34, 1.442695
    %v37 = vpow.pop %v36
    %v38 = vmul.f32 %v35, 1.442695
    %v39 = vpow.pop %v38
    %v40 = vadd.f32 %v37, %v39
    %41 = vadd.xlane.f32.xlu0 %v40
    %v42 = vpop.xlane.xlu0 %41
    %v43 = vmul.f32 %v42, 0.00390625
    %v44 = vlog2.pop %v43
    %v45 = vmul.f32 %v44, 0.6931472
    %v46 = vstv %s24
    %v47 = vrcp.pop %v46
    %s48 = vtos %v47
    %v49 = vstv %s48
    %v50 = vmul.f32 %v45, %v49
    %v51 = vmul.f32 %v50, 1.442695
    %v52 = vpow.pop %v51
    %vm53 = vcmask 7168
    %54 = vst.msk [vmem:[%s2] sm:$0xff] %vm53, %v52
    // Predicated region
    $region14: #{tpu_custom_call.1} parent=1 // pred_check
      _
    $region15: #{tpu_custom_call.1} parent=1 // pred_check_branch
      %56 = sbr.rel (0) target = $region17
    $region16: #{tpu_custom_call.1} parent=1 // pred_region
      _
    $region17: #{tpu_custom_call.1} parent=1 // pred_fallthru
      _
    // Predicated region
    $region18: #{tpu_custom_call.1} parent=1 // pred_check
      _
    $region19: #{tpu_custom_call.1} parent=1 // pred_check_branch
      %58 = sbr.rel (0) target = $region21
    $region20: #{tpu_custom_call.1} parent=1 // pred_region
      _
    $region21: #{tpu_custom_call.1} parent=1 // pred_fallthru
      _
    %59 = vsyncpa [#allocation4], 1

</llo_original>
